<compile_context>
chip_gen: v6e
topology: v6e:2x2x1
jax: 0.10.0
libtpu: 0.0.40
codegen_flags: <defaults>
</compile_context>

<pallas_src>
import jax
import jax.numpy as jnp
from jax import lax
from jax.experimental import pallas as pl
from jax.experimental.pallas import tpu as pltpu


def _encoder_kernel(w_ref, f_ref, o_ref):
    # w_ref: [N, L]       filter bank (constant block index -> resident in VMEM)
    # f_ref: [1, L, tk]   tap-major frames for one (batch, K-tile) block
    # o_ref: [1, N, tk]   output block, NCK layout, lane-dense in K
    y = jnp.dot(w_ref[...], f_ref[0], preferred_element_type=jnp.float32)  # MXU, f32 acc
    o_ref[0] = jnp.maximum(y, 0.0).astype(o_ref.dtype)                     # ReLU + store-cast


def _frames_tap_major(mixture, L, hop, K):
    """frames[m, l, k] = mixture[m, k*hop + l]  ->  [M, L, K] (tap-major).

    Built from L strided slices (one per tap) instead of a gather: lowers to a
    cheap fused strided copy, no gather kernel and no frame-major intermediate.
    """
    M = mixture.shape[0]
    span = (K - 1) * hop + 1
    taps = [lax.slice(mixture, (0, l), (M, l + span), (1, hop)) for l in range(L)]
    return jnp.stack(taps, axis=1)


def _pick_k_tile(K, tk, M):
    """Lane tile width for K (multiple of 128, <= K) and number of K tiles."""
    if K <= 128:
        return K, 1
    tk_cap = max(128, (tk // 128) * 128)
    tk_eff = min(tk_cap, (K // 128) * 128)
    num_kt = pl.cdiv(K, tk_eff)
    # v7x has 2 TensorCores; a small odd grid (worst case 1x1) leaves one core
    # idle.  Split K one notch finer if that evens the step count out cheaply.
    if (M * num_kt) % 2 == 1 and M * num_kt < 8:
        for cand in (tk_eff // 2, 128):
            cand = max(128, (cand // 128) * 128)
            if cand < tk_eff and (M * pl.cdiv(K, cand)) % 2 == 0:
                tk_eff = cand
                num_kt = pl.cdiv(K, cand)
                break
    return tk_eff, num_kt


def encoder_save_pallas(mixture, weight, L, *, tk=1024,
                        compute_dtype=jnp.bfloat16, out_dtype=None):
    """Pallas implementation of EncoderSave.forward.

    Args:
      mixture: [M, T] float32
      weight:  [N, 1, L] float32  (nn.Conv1d(1, N, L, stride=L//2).weight)
      L:       window / kernel length
      tk:      K-tile width in lanes (multiple of 128); 1024 default.
      compute_dtype: MXU operand dtype (bf16 default; accumulation stays f32).
      out_dtype:     output dtype (defaults to compute_dtype).
    Returns:
      mixture_w: [M, N, K] out_dtype, K = (T - L) // (L // 2) + 1
    """
    if out_dtype is None:
        out_dtype = compute_dtype
    M, T = mixture.shape
    N = weight.shape[0]
    hop = L // 2
    K = (T - L) // hop + 1

    tk_eff, num_kt = _pick_k_tile(K, tk, M)
    k_pad = num_kt * tk_eff

    # Cast operands once at the pallas_call boundary (halves frames HBM/VMEM
    # traffic when bf16); f32 accumulation keeps the L-tap reduction accurate.
    mix_c = mixture.astype(compute_dtype)
    w_nl = weight[:, 0, :].astype(compute_dtype)            # [N, L]

    # Pad the small [M, T] mixture (not the 2x-larger frames tensor) so every
    # frame k < k_pad reads in-bounds samples; the output keeps its true K and
    # Pallas masks the partial boundary store.
    t_need = (k_pad - 1) * hop + L
    if t_need > T:
        mix_c = jnp.pad(mix_c, ((0, 0), (0, t_need - T)))

    frames = _frames_tap_major(mix_c, L, hop, k_pad)         # [M, L, Kp]

    # VMEM limit from the actual double-buffered block footprint (+2x slack),
    # clamped to 32 MiB so we never claim v7x's entire 64 MiB of physical VMEM.
    csz = jnp.dtype(compute_dtype).itemsize
    osz = jnp.dtype(out_dtype).itemsize
    block_bytes = (2 * L * tk_eff * csz        # frames block, double-buffered
                   + 2 * N * tk_eff * osz      # output block, double-buffered
                   + 2 * N * L * csz)          # weights (conservatively x2)
    vmem_limit = int(min(max(2 * block_bytes, 8 * 1024 * 1024), 32 * 1024 * 1024))

    out = pl.pallas_call(
        _encoder_kernel,
        out_shape=jax.ShapeDtypeStruct((M, N, K), out_dtype),
        grid_spec=pltpu.PrefetchScalarGridSpec(
            num_scalar_prefetch=0,
            grid=(M, num_kt),
            in_specs=[
                # Weight block index is constant -> resident across the grid.
                # (pipeline_mode=pl.Buffered(1) would document single-buffering
                # but saves <256 KiB; left at the default for robustness.)
                pl.BlockSpec((N, L), lambda m, kt: (0, 0)),
                pl.BlockSpec((1, L, tk_eff), lambda m, kt: (m, 0, kt)),   # frames
            ],
            out_specs=pl.BlockSpec((1, N, tk_eff), lambda m, kt: (m, 0, kt)),
        ),
        compiler_params=pltpu.CompilerParams(
            dimension_semantics=("parallel", "parallel"),
            vmem_limit_bytes=vmem_limit,
        ),
    )(w_nl, frames)
    return out


def encoder_save_reference(mixture, weight, L):
    """Pure-JAX reference (lax conv, f32) for sanity checking."""
    hop = L // 2
    x = mixture[:, None, :]                                  # [M, 1, T]  (NCW)
    y = lax.conv_general_dilated(
        x, weight, window_strides=(hop,), padding="VALID",
        dimension_numbers=("NCH", "OIH", "NCH"))
    return jnp.maximum(y, 0.0)


if __name__ == "__main__":
    root_key = jax.random.PRNGKey(0)

    def run_case(case_id, M, T, L, N, tk=1024, compute_dtype=jnp.bfloat16, tol=2e-2):
        k_x, k_w = jax.random.split(jax.random.fold_in(root_key, case_id))
        mixture = jax.random.normal(k_x, (M, T), dtype=jnp.float32)
        # nn.Conv1d(1, N, kernel_size=L, bias=False) weight shape: [N, 1, L]
        weight = jax.random.normal(k_w, (N, 1, L), dtype=jnp.float32) * 0.1

        out = jax.block_until_ready(
            encoder_save_pallas(mixture, weight, L, tk=tk, compute_dtype=compute_dtype))
        ref = jax.block_until_ready(encoder_save_reference(mixture, weight, L))

        K = (T - L) // (L // 2) + 1
        assert out.shape == ref.shape == (M, N, K), (out.shape, ref.shape)
        err = float(jnp.max(jnp.abs(out.astype(jnp.float32) - ref)))
        assert err <= tol, f"case {case_id}: max abs err {err} > {tol}"
        return out

    # 1) Exact-parity f32 path, tiny single-block case (K = 15 < 128).
    run_case(0, M=2, T=64, L=8, N=32, compute_dtype=jnp.float32, tol=1e-4)
    # 2) Default bf16 path with mixture padding and a masked boundary K-block:
    #    L=16, hop=8, T=1608 -> K=200 -> grid (2, 2), last block partial.
    run_case(1, M=2, T=1608, L=16, N=64)
    # 3) Odd batch (M=1), K=256: exercises the even-grid split for v7x's two
    #    TensorCores (grid becomes (1, 2)) on the bf16 path.
    run_case(2, M=1, T=2056, L=16, N=64)

    print("KERNEL_OK")
</pallas_src>

<mosaic_0001>
module attributes {stable_mosaic.version = 11 : i64} {
  func.func @_encoder_kernel(%arg0: i32, %arg1: i32, %arg2: memref<32x8xf32, #tpu.memory_space<vmem>>, %arg3: memref<1x8x15xf32, #tpu.memory_space<vmem>>, %arg4: memref<1x32x15xf32, #tpu.memory_space<vmem>>) attributes {dimension_semantics = [#tpu.dimension_semantics<parallel>, #tpu.dimension_semantics<parallel>], iteration_bounds = array<i64: 2, 1>, scalar_prefetch = 0 : i64, scratch_operands = 0 : i64, tpu.core_type = #tpu.core_type<tc>, window_params = [{pipeline_mode = #tpu.pipeline_mode<synchronous>, transform_indices = @transform_0, window_bounds = array<i64: 32, 8>}, {transform_indices = @transform_1, window_bounds = array<i64: 1, 8, 15>}, {transform_indices = @transform_2, window_bounds = array<i64: 1, 32, 15>}]} {
    %c0 = arith.constant 0 : index
    %c0_0 = arith.constant 0 : index
    %0 = vector.load %arg2[%c0, %c0_0] : memref<32x8xf32, #tpu.memory_space<vmem>>, vector<32x8xf32>
    %c0_1 = arith.constant 0 : index
    %c0_2 = arith.constant 0 : index
    %c0_3 = arith.constant 0 : index
    %1 = vector.load %arg3[%c0_1, %c0_2, %c0_3] : memref<1x8x15xf32, #tpu.memory_space<vmem>>, vector<1x8x15xf32>
    %2 = vector.shape_cast %1 : vector<1x8x15xf32> to vector<8x15xf32>
    %cst = arith.constant dense<0.000000e+00> : vector<32x15xf32>
    %3 = tpu.matmul %0, %2, %cst {dimension_numbers = #tpu.dot_dimension_numbers<[1], [0], [0], [1], [0, 0, 1, 1], [], []>} : vector<32x8xf32>, vector<8x15xf32>, vector<32x15xf32> -> vector<32x15xf32>
    %cst_4 = arith.constant 0.000000e+00 : f32
    %4 = vector.broadcast %cst_4 : f32 to vector<32x15xf32>
    %5 = arith.maximumf %3, %4 : vector<32x15xf32>
    %c0_5 = arith.constant 0 : index
    %c0_6 = arith.constant 0 : index
    %c0_7 = arith.constant 0 : index
    %6 = vector.load %arg4[%c0_5, %c0_6, %c0_7] : memref<1x32x15xf32, #tpu.memory_space<vmem>>, vector<1x32x15xf32>
    %7 = vector.shape_cast %6 : vector<1x32x15xf32> to vector<32x15xf32>
    %8 = vector.shape_cast %5 : vector<32x15xf32> to vector<1x32x15xf32>
    tpu.vector_store %arg4[%c0_5, %c0_6, %c0_7], %8 {strides = array<i32>} : memref<1x32x15xf32, #tpu.memory_space<vmem>>, vector<1x32x15xf32>,
    return
  }
  func.func @transform_0(%arg0: i32, %arg1: i32) -> (i32, i32) {
    %c0_i32 = arith.constant 0 : i32
    %c0_i32_0 = arith.constant 0 : i32
    %c0_i32_1 = arith.constant 0 : i32
    return %c0_i32, %c0_i32_0 : i32, i32
  }
  func.func @transform_1(%arg0: i32, %arg1: i32) -> (i32, i32, i32) {
    %c0_i32 = arith.constant 0 : i32
    %c0_i32_0 = arith.constant 0 : i32
    return %arg0, %c0_i32, %arg1 : i32, i32, i32
  }
  func.func @transform_2(%arg0: i32, %arg1: i32) -> (i32, i32, i32) {
    %c0_i32 = arith.constant 0 : i32
    %c0_i32_0 = arith.constant 0 : i32
    return %arg0, %c0_i32, %arg1 : i32, i32, i32
  }
}

</mosaic_0001>

<llo_original>
// kernel: tpu_custom_call.1
$region0: #{tpu_custom_call.1}
  #allocation0 [shape = 'u32[]', space=smem, size = 0x4, offset = 0x4, fixed_abs, tag = 'smem constant byte address 0x4 - core index']
  #allocation1 [shape = 'u32[144,128]{1,0:T(1,128)}', space=vmem, size = 0x12000, scoped, tag = 'internal scratch']
  %s0 = inlined_call_operand.vmem [shape: f32[32,8], index: 0, kind: input, shape index: {}]
  %s1 = inlined_call_operand.vmem [shape: f32[2,8,15], index: 1, kind: input, shape index: {}]
  %s2 = inlined_call_operand.vmem [shape: f32[2,32,15], index: 2, kind: output, shape index: {}]
  %s3 = sld [smem:[#allocation0]]
  $region41: #{tpu_custom_call.1} parent=0
    _
  %s5 = ssub.s32 1, %s3
  %s6 = scalar_select 0, %s5, %s3
  loop: start=0, step=1, limit=4
  $region2: #{tpu_custom_call.1} parent=0 // loop_pre_header
    _
  $region3: #{tpu_custom_call.1} parent=0 // loop_header
    %s8 = sphi 0, %s12
    %p9 = scmp.ge.s32.totalorder %s8, 4
    %s15 = sphi 0, %s27
    %s16 = sphi 0, %s23
    %s17 = sphi 0, %s15
    %s18 = sphi 0, %s16
    %s19 = sphi 0, %s17
    %s20 = sphi 0, %s18
    %s28 = sphi 0, %s28
    %s30 = sphi 0, %s28
    %s31 = sphi 0, %s30
    %s45 = sphi 0, %s31
    %s53 = sphi 0, %s55
    %s56 = sphi 0, %s53
    %s57 = sphi 0, %s56
    %s73 = sphi 0, %s57
    %s81 = sphi 0, %s83
    %s84 = sphi 0, %s81
    %s85 = sphi 0, %s84
    %s101 = sphi 0, %s85
  $region4: #{tpu_custom_call.1} parent=0 // loop_header_branch
    %11 = sbr.rel (%p9) target = $region8
  $region5: #{tpu_custom_call.1} parent=0 // loop_body
    %s13 = ssub.s32 %s8, 1
    %s14 = ssub.s32 %s8, 2
    %s21 = sadd.s32 1, %s16
    %p22 = scmp.ge.s32.totalorder %s21, 1
    %s23 = scalar_select %p22, 0, %s21
    %s24 = sadd.s32 1, %s15
    %s25 = scalar_select %p22, %s24, %s15
    %p26 = scmp.ge.s32.totalorder %s25, 2
    %s27 = scalar_select %p26, 0, %s25
    %s29 = sadd.s32 %s28, 1
    %p32 = scmp.eq.s32.totalorder %s8, 1
    %p33 = scmp.ne.s32.totalorder %s28, %s30
    %p34 = scmp.eq.s32.totalorder %s8, 0
    %p35 = por %p33, %p34
    %p36 = scmp.ne.s32.totalorder %s28, %s30
    %p37 = scmp.eq.s32.totalorder %s13, 1
    %p38 = por %p36, %p37
    %p39 = scmp.ne.s32.totalorder %s30, %s31
    %p40 = scmp.eq.s32.totalorder %s13, 0
    %p41 = por %p39, %p40
    %p42 = scmp.ne.s32.totalorder %s30, %s31
    %p43 = scmp.eq.s32.totalorder %s14, 1
    %p44 = por %p42, %p43
    %p46 = scmp.ne.s32.totalorder %s31, %s45
    %p47 = scmp.eq.s32.totalorder %s14, 0
    %p48 = por %p46, %p47
    %s49 = ssub.s32 %s15, %s27
    %s50 = ssub.s32 %s16, %s23
    %s51 = sor.u32 %s49, %s50
    %p52 = scmp.eq.s32.totalorder %s51, 0
    %s54 = sadd.s32 %s53, 1
    %s55 = scalar_select %p52, %s53, %s54
    %p58 = pneg %p52
    %p59 = scmp.eq.s32.totalorder %s8, 1
    %p60 = por %p58, %p59
    %p61 = scmp.ne.s32.totalorder %s53, %s56
    %p62 = scmp.eq.s32.totalorder %s8, 0
    %p63 = por %p61, %p62
    %p64 = scmp.ne.s32.totalorder %s53, %s56
    %p65 = scmp.eq.s32.totalorder %s13, 1
    %p66 = por %p64, %p65
    %p67 = scmp.ne.s32.totalorder %s56, %s57
    %p68 = scmp.eq.s32.totalorder %s13, 0
    %p69 = por %p67, %p68
    %p70 = scmp.ne.s32.totalorder %s56, %s57
    %p71 = scmp.eq.s32.totalorder %s14, 1
    %p72 = por %p70, %p71
    %p74 = scmp.ne.s32.totalorder %s57, %s73
    %p75 = scmp.eq.s32.totalorder %s14, 0
    %p76 = por %p74, %p75
    %s77 = ssub.s32 %s15, %s27
    %s78 = ssub.s32 %s16, %s23
    %s79 = sor.u32 %s77, %s78
    %p80 = scmp.eq.s32.totalorder %s79, 0
    %s82 = sadd.s32 %s81, 1
    %s83 = scalar_select %p80, %s81, %s82
    %p86 = pneg %p80
    %p87 = scmp.eq.s32.totalorder %s8, 1
    %p88 = por %p86, %p87
    %p89 = scmp.ne.s32.totalorder %s81, %s84
    %p90 = scmp.eq.s32.totalorder %s8, 0
    %p91 = por %p89, %p90
    %p92 = scmp.ne.s32.totalorder %s81, %s84
    %p93 = scmp.eq.s32.totalorder %s13, 1
    %p94 = por %p92, %p93
    %p95 = scmp.ne.s32.totalorder %s84, %s85
    %p96 = scmp.eq.s32.totalorder %s13, 0
    %p97 = por %p95, %p96
    %p98 = scmp.ne.s32.totalorder %s84, %s85
    %p99 = scmp.eq.s32.totalorder %s14, 1
    %p100 = por %p98, %p99
    %p102 = scmp.ne.s32.totalorder %s85, %s101
    %p103 = scmp.eq.s32.totalorder %s14, 0
    %p104 = por %p102, %p103
    %p105 = scmp.le.s32.totalorder 1, %s8
    %p106 = scmp.lt.s32.totalorder %s8, 3
    %p107 = pnand %p105, %p106
    %p108 = pneg %p107
    // Predicated region
    $region9: #{tpu_custom_call.1} parent=5 // pred_check
      _
    $region10: #{tpu_custom_call.1} parent=5 // pred_check_branch
      %110 = sbr.rel (%p107) target = $region12
    $region11: #{tpu_custom_call.1} parent=5 // pred_region
      %s111 = ssub.s32 %s8, 1
      // Predicated region
      $region13: #{tpu_custom_call.1} parent=11 // pred_check
        %p112 = pneg %p41
      $region14: #{tpu_custom_call.1} parent=11 // pred_check_branch
        %114 = sbr.rel (%p112) target = $region16
      $region15: #{tpu_custom_call.1} parent=11 // pred_region
        _
      $region16: #{tpu_custom_call.1} parent=11 // pred_fallthru
        _
    $region12: #{tpu_custom_call.1} parent=5 // pred_fallthru
      _
    %p115 = scmp.lt.s32.totalorder %s8, 2
    // Predicated region
    $region17: #{tpu_custom_call.1} parent=5 // pred_check
      %p116 = pneg %p115
    $region18: #{tpu_custom_call.1} parent=5 // pred_check_branch
      %118 = sbr.rel (%p116) target = $region20
    $region19: #{tpu_custom_call.1} parent=5 // pred_region
      // Predicated region
      $region21: #{tpu_custom_call.1} parent=19 // pred_check
        %p119 = pneg %p63
      $region22: #{tpu_custom_call.1} parent=19 // pred_check_branch
        %121 = sbr.rel (%p119) target = $region24
      $region23: #{tpu_custom_call.1} parent=19 // pred_region
        %p122 = scmp.lt.s32.totalorder %s15, 1
        %s123 = scalar_select %p122, %s15, 1
        %p124 = scmp.lt.s32.totalorder %s16, 0
        %s125 = scalar_select %p124, %s16, 0
        %s126 = sadd.s32 %s125, %s123
        %s127 = smul.addr %s126, 8
        %s128 = scalar_lea.vmem %s1, %s127
      $region24: #{tpu_custom_call.1} parent=19 // pred_fallthru
        _
    $region20: #{tpu_custom_call.1} parent=5 // pred_fallthru
      _
    %p129 = scmp.le.s32.totalorder 1, %s8
    %p130 = scmp.lt.s32.totalorder %s8, 3
    %p131 = pnand %p129, %p130
    %p132 = pneg %p131
    // Predicated region
    $region25: #{tpu_custom_call.1} parent=5 // pred_check
      _
    $region26: #{tpu_custom_call.1} parent=5 // pred_check_branch
      %134 = sbr.rel (%p131) target = $region28
    $region27: #{tpu_custom_call.1} parent=5 // pred_region
      %s135 = ssub.s32 %s8, 1
      %p136 = pneg %p41
      %p137 = pneg %p38
      %p138 = scmp.lt.s32.totalorder %s17, 1
      %s139 = scalar_select %p138, %s17, 1
      %p140 = scmp.lt.s32.totalorder %s18, 0
      %s141 = scalar_select %p140, %s18, 0
      %s142 = sadd.s32 %s141, %s139
      %s143 = smul.addr %s142, 8
      %s144 = scalar_lea.vmem %s1, %s143
      %p145 = pneg %p69
      %p146 = pneg %p66
      %p147 = pneg %p97
      %p148 = pneg %p94
      %p149 = scmp.lt.s32.totalorder %s17, 1
      %s150 = scalar_select %p149, %s17, 1
      %p151 = scmp.lt.s32.totalorder %s18, 0
      %s152 = scalar_select %p151, %s18, 0
      %s153 = smul.addr %s150, 4
      %s154 = sadd.s32 %s152, %s153
      %s155 = smul.addr %s154, 8
      %s156 = scalar_lea.vmem %s2, %s155
      %p157 = scmp.lt.s32.totalorder %s17, 1
      %s158 = scalar_select %p157, %s17, 1
      %p159 = scmp.lt.s32.totalorder %s18, 0
      %s160 = scalar_select %p159, %s18, 0
      %s161 = sadd.s32 %s160, %s158
      %s162 = smul.addr %s161, 8
      %s163 = scalar_lea.vmem %s1, %s162
      %p164 = scmp.lt.s32.totalorder %s17, 1
      %s165 = scalar_select %p164, %s17, 1
      %p166 = scmp.lt.s32.totalorder %s18, 0
      %s167 = scalar_select %p166, %s18, 0
      %s168 = smul.addr %s165, 4
      %s169 = sadd.s32 %s167, %s168
      %s170 = smul.addr %s169, 8
      %s171 = scalar_lea.vmem %s2, %s170
      %v172 = vld [vmem:[%s0] sm:$0xff]
      %v173 = vld [vmem:[%s0 + $0x8] sm:$0xff]
      %v174 = vld [vmem:[%s0 + $0x10] sm:$0xff]
      %v175 = vld [vmem:[%s0 + $0x18] sm:$0xff]
      %v176 = vld [vmem:[%s163] sm:$0xff]
      %vm177 = vcmask 64512
      %v179 = vsel %vm177, %v172, 0
      %v182 = vsel %vm177, %v173, 0
      %v185 = vsel %vm177, %v174, 0
      %v188 = vsel %vm177, %v175, 0
      %190 = vmatprep.subr.mxu0 0.0
      %191 = vmatpush1.msra.mxu0 0.0
      %192 = vmatprep.subr.mxu0 0.0
      %193 = vmatpush1.msra.mxu0 0.0
      %194 = vmatprep.subr.mxu0 0.0
      %195 = vmatpush1.msra.mxu0 0.0
      %196 = vmatprep.subr.mxu0 0.0
      %197 = vmatpush1.msra.mxu0 0.0
      %198 = vmatprep.subr.mxu0 0.0
      %199 = vmatpush1.msra.mxu0 0.0
      %200 = vmatprep.subr.mxu0 0.0
      %201 = vmatpush1.msra.mxu0 0.0
      %202 = vmatprep.subr.mxu0 0.0
      %203 = vmatpush1.msra.mxu0 0.0
      %204 = vmatprep.subr.mxu0 0.0
      %205 = vmatpush1.msra.mxu0 0.0
      %206 = vmatprep.subr.mxu0 0.0
      %207 = vmatpush1.msra.mxu0 0.0
      %208 = vmatprep.subr.mxu0 0.0
      %209 = vmatpush1.msra.mxu0 0.0
      %210 = vmatprep.subr.mxu0 0.0
      %211 = vmatpush1.msra.mxu0 0.0
      %212 = vmatprep.subr.mxu0 0.0
      %213 = vmatpush1.msra.mxu0 0.0
      %214 = vmatprep.subr.mxu0 0.0
      %215 = vmatpush1.msra.mxu0 0.0
      %216 = vmatprep.subr.mxu0 0.0
      %217 = vmatpush1.msra.mxu0 0.0
      %218 = vmatprep.subr.mxu0 0.0
      %219 = vmatpush1.msra.mxu0 0.0
      %220 = vmatprep.subr.mxu0 0.0
      %221 = vmatpush1.msra.mxu0 %v176
      %222 = vmatprep.subr.mxu0 0.0
      %223 = vmatpush2.msra.mxu0 0.0
      %224 = vmatprep.subr.mxu0 0.0
      %225 = vmatpush2.msra.mxu0 0.0
      %226 = vmatprep.subr.mxu0 0.0
      %227 = vmatpush2.msra.mxu0 0.0
      %228 = vmatprep.subr.mxu0 0.0
      %229 = vmatpush2.msra.mxu0 0.0
      %230 = vmatprep.subr.mxu0 0.0
      %231 = vmatpush2.msra.mxu0 0.0
      %232 = vmatprep.subr.mxu0 0.0
      %233 = vmatpush2.msra.mxu0 0.0
      %234 = vmatprep.subr.mxu0 0.0
      %235 = vmatpush2.msra.mxu0 0.0
      %236 = vmatprep.subr.mxu0 0.0
      %237 = vmatpush2.msra.mxu0 0.0
      %238 = vmatprep.subr.mxu0 0.0
      %239 = vmatpush2.msra.mxu0 0.0
      %240 = vmatprep.subr.mxu0 0.0
      %241 = vmatpush2.msra.mxu0 0.0
      %242 = vmatprep.subr.mxu0 0.0
      %243 = vmatpush2.msra.mxu0 0.0
      %244 = vmatprep.subr.mxu0 0.0
      %245 = vmatpush2.msra.mxu0 0.0
      %246 = vmatprep.subr.mxu0 0.0
      %247 = vmatpush2.msra.mxu0 0.0
      %248 = vmatprep.subr.mxu0 0.0
      %249 = vmatpush2.msra.mxu0 0.0
      %250 = vmatprep.subr.mxu0 0.0
      %251 = vmatpush2.msra.mxu0 0.0
      %252 = vmatprep.subr.mxu0 0.0
      %253 = vmatpush2.msra.mxu0 0.0
      %254 = vmatprep.mubr.f32.mxu0 0.0
      %255 = vmatmul.mubr.f32.gmra.mxu0 %v179
      %v256 = vpop.f32.mrf.mxu0
      %v257 = vadd.f32 0.0, %v256
      %v258 = vpop.f32.mrf.mxu0
      %259 = vmatprep.mubr.f32.mxu0 0.0
      %260 = vmatmul.mubr.f32.gmra.mxu0 %v182
      %v261 = vpop.f32.mrf.mxu0
      %v262 = vadd.f32 0.0, %v261
      %v263 = vpop.f32.mrf.mxu0
      %264 = vmatprep.mubr.f32.mxu0 0.0
      %265 = vmatmul.mubr.f32.gmra.mxu0 %v185
      %v266 = vpop.f32.mrf.mxu0
      %v267 = vadd.f32 0.0, %v266
      %v268 = vpop.f32.mrf.mxu0
      %269 = vmatprep.mubr.f32.mxu0 0.0
      %270 = vmatmul.mubr.f32.gmra.mxu0 %v188
      %v271 = vpop.f32.mrf.mxu0
      %v272 = vadd.f32 0.0, %v271
      %v273 = vpop.f32.mrf.mxu0
      %274 = vdwg.mxu0
      %v275 = vmax.f32 %v257, 0.0
      %v276 = vmax.f32 %v262, 0.0
      %v277 = vmax.f32 %v267, 0.0
      %v278 = vmax.f32 %v272, 0.0
      %vm279 = vcmask 121856
      %280 = vst.msk [vmem:[%s171] sm:$0xff] %vm279, %v275
      %281 = vst.msk [vmem:[%s171 + $0x8] sm:$0xff] %vm279, %v276
      %282 = vst.msk [vmem:[%s171 + $0x10] sm:$0xff] %vm279, %v277
      %283 = vst.msk [vmem:[%s171 + $0x18] sm:$0xff] %vm279, %v278
      %p284 = scmp.lt.s32.totalorder %s17, 1
      %s285 = scalar_select %p284, %s17, 1
      %p286 = scmp.lt.s32.totalorder %s18, 0
      %s287 = scalar_select %p286, %s18, 0
      %s288 = smul.addr %s285, 4
      %s289 = sadd.s32 %s287, %s288
      %s290 = smul.addr %s289, 8
      %s291 = scalar_lea.vmem %s2, %s290
      // Predicated region
      $region29: #{tpu_custom_call.1} parent=27 // pred_check
        %p292 = pneg %p94
      $region30: #{tpu_custom_call.1} parent=27 // pred_check_branch
        %294 = sbr.rel (%p292) target = $region32
      $region31: #{tpu_custom_call.1} parent=27 // pred_region
        _
      $region32: #{tpu_custom_call.1} parent=27 // pred_fallthru
        _
    $region28: #{tpu_custom_call.1} parent=5 // pred_fallthru
      _
    %p295 = scmp.le.s32.totalorder 2, %s8
    // Predicated region
    $region33: #{tpu_custom_call.1} parent=5 // pred_check
      %p296 = pneg %p295
    $region34: #{tpu_custom_call.1} parent=5 // pred_check_branch
      %298 = sbr.rel (%p296) target = $region36
    $region35: #{tpu_custom_call.1} parent=5 // pred_region
      %s299 = ssub.s32 %s8, 2
      // Predicated region
      $region37: #{tpu_custom_call.1} parent=35 // pred_check
        %p300 = pneg %p100
      $region38: #{tpu_custom_call.1} parent=35 // pred_check_branch
        %302 = sbr.rel (%p300) target = $region40
      $region39: #{tpu_custom_call.1} parent=35 // pred_region
        %p303 = scmp.lt.s32.totalorder %s19, 1
        %s304 = scalar_select %p303, %s19, 1
        %p305 = scmp.lt.s32.totalorder %s20, 0
        %s306 = scalar_select %p305, %s20, 0
        %s307 = smul.addr %s304, 4
        %s308 = sadd.s32 %s306, %s307
        %s309 = smul.addr %s308, 8
        %s310 = scalar_lea.vmem %s2, %s309
      $region40: #{tpu_custom_call.1} parent=35 // pred_fallthru
        _
    $region36: #{tpu_custom_call.1} parent=5 // pred_fallthru
      _
  $region6: #{tpu_custom_call.1} parent=0 // loop_footer
    %s12 = sadd.s32 1, %s8
  $region7: #{tpu_custom_call.1} parent=0 // loop_footer_branch
    %7 = sbr.rel target = $region3
  $region8: #{tpu_custom_call.1} parent=0 // loop_exit
    _

</llo_original>
